<compile_context>
chip_gen: v5e
topology: v5e:2x2
jax: 0.10.0
libtpu: 0.0.40
codegen_flags: <defaults>
</compile_context>

<pallas_src>
import numpy as np

import jax
import jax.numpy as jnp
from jax.experimental import pallas as pl
from jax.experimental.pallas import tpu as pltpu


# ----------------------------------------------------------------------------
# Deterministic noise schedule (ldm "linear" beta schedule, celebahq-ldm-vq-4).
# ----------------------------------------------------------------------------
TIMESTEPS = 1000
LINEAR_START = 0.0015
LINEAR_END = 0.0195

LANE = 512            # preferred lane-dense last dim (multiple of 128)
MAX_TILE_ROWS = 512   # rows per grid step; 512*512*4B = 1 MiB per stream/tile


def make_schedule():
    betas = (
        np.linspace(LINEAR_START ** 0.5, LINEAR_END ** 0.5, TIMESTEPS,
                    dtype=np.float64) ** 2
    )
    alphas = 1.0 - betas
    alphas_cumprod = np.cumprod(alphas)
    return (
        alphas_cumprod.astype(np.float32),
        np.sqrt(alphas_cumprod).astype(np.float32),
        np.sqrt(1.0 - alphas_cumprod).astype(np.float32),
    )


def _is_static(i):
    return isinstance(i, (int, np.integer))


def _is_static_val(v):
    return isinstance(v, (int, float, np.integer, np.floating))


def _coef_array(*vals):
    """Pack coefficients: stays a host numpy constant when all are static."""
    if all(_is_static_val(v) for v in vals):
        return np.asarray(vals, dtype=np.float32)
    return jnp.stack([jnp.asarray(v, jnp.float32) for v in vals])


# ----------------------------------------------------------------------------
# Pallas kernels: pure axpy over lane-dense tiles.  Coefficients live in SMEM.
# ----------------------------------------------------------------------------
def _axpy2_kernel(coef_ref, a_ref, b_ref, out_ref):
    out_ref[...] = coef_ref[0] * a_ref[...] + coef_ref[1] * b_ref[...]


def _axpy3_kernel(coef_ref, a_ref, b_ref, c_ref, out_ref):
    out_ref[...] = (
        coef_ref[0] * a_ref[...]
        + coef_ref[1] * b_ref[...]
        + coef_ref[2] * c_ref[...]
    )


_SMEM_SPEC = pl.BlockSpec(memory_space=pltpu.MemorySpace.SMEM)


def _layout(n):
    """Pick (lane, rows, tile_rows) for a lane-dense slab of n f32 elements.

    Prefers a layout where rows*lane == n (no padding, free reshape).  The
    single-block case (rows == tile_rows) is legal even if rows % 8 != 0
    because the block equals the full array dims.
    """
    for lane in (512, 256, 128):
        if n % lane:
            continue
        rows = n // lane
        if rows <= MAX_TILE_ROWS:
            return lane, rows, rows                 # one full-array block
        if rows % MAX_TILE_ROWS == 0:
            return lane, rows, MAX_TILE_ROWS        # even, pad-free tiling
    # Fallback (sizes not divisible by 128): pad to an even (rows, 512) grid.
    lane = LANE
    rows = pl.cdiv(n, lane)
    tile_rows = min(MAX_TILE_ROWS, ((rows + 7) // 8) * 8)
    rows = pl.cdiv(rows, tile_rows) * tile_rows
    return lane, rows, tile_rows


def _axpy_call(coefs, *tensors):
    """out = sum_i coefs[i] * tensors[i]   (elementwise, float32)."""
    kernel = _axpy2_kernel if len(tensors) == 2 else _axpy3_kernel
    shape = tensors[0].shape
    n = int(np.prod(shape)) if shape else 1
    lane, rows, tile_rows = _layout(n)
    padded_n = rows * lane
    grid = rows // tile_rows

    def to_slab(t):
        flat = t.astype(jnp.float32).reshape(-1)
        if padded_n != n:
            flat = jnp.pad(flat, (0, padded_n - n))
        return flat.reshape(rows, lane)

    slabs = [to_slab(t) for t in tensors]
    block = pl.BlockSpec((tile_rows, lane), lambda i: (i, 0))

    out = pl.pallas_call(
        kernel,
        grid=(grid,),
        out_shape=jax.ShapeDtypeStruct((rows, lane), jnp.float32),
        in_specs=[_SMEM_SPEC] + [block] * len(slabs),
        out_specs=block,
        compiler_params=pltpu.CompilerParams(
            dimension_semantics=("parallel",),
            vmem_limit_bytes=32 * 1024 * 1024,
        ),
        cost_estimate=pl.CostEstimate(
            flops=(2 * len(slabs) - 1) * padded_n,
            transcendentals=0,
            bytes_accessed=4 * (len(slabs) + 1) * padded_n,
        ),
    )(jnp.asarray(coefs, jnp.float32), *slabs)

    out = out.reshape(-1)
    if padded_n != n:
        out = out[:n]
    return out.reshape(shape)


# ----------------------------------------------------------------------------
# JAX/Pallas port of the numeric forward path of `Face`.
# ----------------------------------------------------------------------------
class FacePallas:
    def __init__(self, eta=0.0):
        self.eta = float(eta)
        (np_ac, np_sac, np_s1mac) = make_schedule()
        # host copies (static-index fast path: zero device ops for coefs)
        self._np_alphas_cumprod = np_ac
        self._np_sqrt_alphas_cumprod = np_sac
        self._np_sqrt_one_minus_alphas_cumprod = np_s1mac
        # device copies (traced-index path)
        self._alphas_cumprod = jnp.asarray(np_ac)
        self._sqrt_alphas_cumprod = jnp.asarray(np_sac)
        self._sqrt_one_minus_alphas_cumprod = jnp.asarray(np_s1mac)

    # ---- schedule scalar accessors (glue) ----
    def alphas_cumprod(self, index):
        if _is_static(index):
            return float(self._np_alphas_cumprod[index])
        return self._alphas_cumprod[index]

    def sqrt_alphas_cumprod(self, index):
        if _is_static(index):
            return float(self._np_sqrt_alphas_cumprod[index])
        return self._sqrt_alphas_cumprod[index]

    def sqrt_one_minus_alphas_cumprod(self, index):
        if _is_static(index):
            return float(self._np_sqrt_one_minus_alphas_cumprod[index])
        return self._sqrt_one_minus_alphas_cumprod[index]

    @staticmethod
    def latent_shape(height, width):
        return [3, height // 4, width // 4]

    def random_latents(self, images_shape, key):
        b = images_shape[0]
        return jax.random.normal(
            key, (b, *self.latent_shape(*images_shape[-2:])), dtype=jnp.float32
        )

    def schedule_indices(self, from_index=999, to_index=50, n_steps=None):
        if from_index < to_index:
            raise ValueError("from_index must be greater than to_index")
        if n_steps is None:
            n_steps = (from_index - to_index) // 2
        schedule = np.linspace(from_index, to_index, n_steps).astype(np.int64)
        if np.any(schedule[:-1] == schedule[1:]):
            raise ValueError("Schedule indices must be unique")
        return np.stack([schedule[:-1], schedule[1:]], axis=1)

    # ---- coefficient folding (scalar algebra on tiny schedule values) ----
    def _denoise_coefs(self, index):
        inv = 1.0 / self.sqrt_alphas_cumprod(index)
        return inv, -self.sqrt_one_minus_alphas_cumprod(index) * inv

    def _step_coefs(self, from_index, to_index):
        static = _is_static(from_index) and _is_static(to_index)
        xp = np if static else jnp
        from_ac = self.alphas_cumprod(from_index)
        to_ac = self.alphas_cumprod(to_index)
        from_s1m = self.sqrt_one_minus_alphas_cumprod(from_index)
        sigma = self.eta * xp.sqrt(
            (1.0 - to_ac) / (1.0 - from_ac) * (1.0 - from_ac / to_ac)
        )
        # clamp avoids NaN from fp32 round-off when eta > 0 at small to_index
        a = xp.sqrt(xp.maximum(1.0 - to_ac - sigma * sigma, 0.0)) / from_s1m
        b = xp.sqrt(to_ac) - a * xp.sqrt(from_ac)
        if static:
            return float(a), float(b), float(sigma)
        return a, b, sigma

    @staticmethod
    def _check_index(index):
        if not _is_static(index):
            return
        if index >= TIMESTEPS:
            raise ValueError("index must be less than 1000")
        if index < 0:
            raise ValueError("index must be non-negative")

    # ---- forward / denoise / diffuse / step ----
    def forward(self, latents, index, eps):
        # TODO(synk): reference forward calls self.velocity (undefined in the
        # source); the closest well-defined numeric path is denoise().
        return self.denoise(latents, index, eps=eps)

    def denoise(self, latents, index, eps):
        self._check_index(index)
        c0, c1 = self._denoise_coefs(index)
        return _axpy_call(_coef_array(c0, c1), latents, eps)

    def diffuse(self, latents, index, noise):
        if latents.shape != noise.shape:
            raise ValueError("Noise shape must be the same as latent shape")
        coefs = _coef_array(self.sqrt_alphas_cumprod(index),
                            self.sqrt_one_minus_alphas_cumprod(index))
        return _axpy_call(coefs, latents, noise)

    def step(self, from_latents, predicted_denoised_latents, from_index,
             to_index, noise=None):
        if _is_static(from_index) and _is_static(to_index) and to_index > from_index:
            raise ValueError("to_index must be smaller than from_index")
        if noise is not None and from_latents.shape != noise.shape:
            raise ValueError("Noise shape must be the same as latent shape")
        a, b, sigma = self._step_coefs(from_index, to_index)
        if self.eta == 0.0:
            # DDIM deterministic path: the noise stream is dropped entirely.
            return _axpy_call(_coef_array(a, b),
                              from_latents, predicted_denoised_latents)
        if noise is None:
            raise ValueError("noise must be provided explicitly when eta != 0")
        return _axpy_call(_coef_array(a, b, sigma),
                          from_latents, predicted_denoised_latents, noise)

    def denoise_step(self, diffused_latents, eps, from_index, to_index,
                     noise=None):
        """Fused denoise(from_index) + step(from_index -> to_index).

        One kernel, one HBM pass: the intermediate denoised latents never hit
        HBM.  Returns the next diffused latents.
        """
        self._check_index(from_index)
        if _is_static(from_index) and _is_static(to_index) and to_index > from_index:
            raise ValueError("to_index must be smaller than from_index")
        c0, c1 = self._denoise_coefs(from_index)
        a, b, sigma = self._step_coefs(from_index, to_index)
        # stepped = a*x + b*(c0*x + c1*eps) + sigma*noise
        ca = a + b * c0
        cb = b * c1
        if self.eta == 0.0:
            return _axpy_call(_coef_array(ca, cb), diffused_latents, eps)
        if noise is None:
            raise ValueError("noise must be provided explicitly when eta != 0")
        if diffused_latents.shape != noise.shape:
            raise ValueError("Noise shape must be the same as latent shape")
        return _axpy_call(_coef_array(ca, cb, sigma),
                          diffused_latents, eps, noise)


# ----------------------------------------------------------------------------
# Pure-JAX references for verification
# ----------------------------------------------------------------------------
def _ref_denoise(model, latents, index, eps):
    return (latents - model.sqrt_one_minus_alphas_cumprod(index) * eps) / jnp.sqrt(
        jnp.asarray(model.alphas_cumprod(index), jnp.float32)
    )


def _ref_diffuse(model, latents, index, noise):
    return (model.sqrt_alphas_cumprod(index) * latents
            + model.sqrt_one_minus_alphas_cumprod(index) * noise)


def _ref_step(model, from_latents, denoised, from_index, to_index, noise):
    from_ac = jnp.asarray(model.alphas_cumprod(from_index), jnp.float32)
    to_ac = jnp.asarray(model.alphas_cumprod(to_index), jnp.float32)
    from_s1m = model.sqrt_one_minus_alphas_cumprod(from_index)
    sigma = model.eta * jnp.sqrt(
        (1 - to_ac) / (1 - from_ac) * (1 - from_ac / to_ac)
    )
    eps = (from_latents - denoised * jnp.sqrt(from_ac)) / from_s1m
    dir_xt = jnp.sqrt(1.0 - to_ac - sigma ** 2) * eps
    return jnp.sqrt(to_ac) * denoised + dir_xt + sigma * noise


if __name__ == "__main__":
    key = jax.random.PRNGKey(0)
    k1, k2, k3 = jax.random.split(key, 3)

    model = FacePallas(eta=0.0)
    model_eta = FacePallas(eta=0.3)

    # small shapes: images (2, 3, 64, 64) -> latents (2, 3, 16, 16)
    images_shape = (2, 3, 64, 64)
    latents = model.random_latents(images_shape, k1)          # (2, 3, 16, 16)
    eps = jax.random.normal(k2, latents.shape, jnp.float32)   # synthetic UNet eps
    noise = jax.random.normal(k3, latents.shape, jnp.float32)

    from_index, to_index = 500, 450

    denoised = model.forward(latents, from_index, eps)
    stepped = model.step(latents, denoised, from_index, to_index)
    diffused = model.diffuse(latents, from_index, noise)
    fused = model.denoise_step(latents, eps, from_index, to_index)
    stepped_eta = model_eta.step(latents, denoised, from_index, to_index, noise)
    jax.block_until_ready((denoised, stepped, diffused, fused, stepped_eta))

    # verify against pure-JAX references
    zero_noise = jnp.zeros_like(noise)
    ref_den = _ref_denoise(model, latents, from_index, eps)
    ref_stp = _ref_step(model, latents, ref_den, from_index, to_index, zero_noise)
    ref_dif = _ref_diffuse(model, latents, from_index, noise)
    ref_fused = _ref_step(model, latents, ref_den, from_index, to_index,
                          zero_noise)
    ref_stp_eta = _ref_step(model_eta, latents, ref_den, from_index, to_index,
                            noise)

    assert denoised.shape == latents.shape
    assert jnp.allclose(denoised, ref_den, rtol=1e-4, atol=1e-4)
    assert jnp.allclose(stepped, ref_stp, rtol=1e-4, atol=1e-4)
    assert jnp.allclose(diffused, ref_dif, rtol=1e-4, atol=1e-4)
    assert jnp.allclose(fused, ref_fused, rtol=1e-4, atol=1e-4)
    assert jnp.allclose(stepped_eta, ref_stp_eta, rtol=1e-4, atol=1e-4)

    print("KERNEL_OK")
</pallas_src>

<mosaic_0001>
module attributes {stable_mosaic.version = 11 : i64} {
  func.func @_axpy2_kernel(%arg0: i32, %arg1: memref<2xf32, #tpu.memory_space<smem>>, %arg2: memref<3x512xf32, #tpu.memory_space<vmem>>, %arg3: memref<3x512xf32, #tpu.memory_space<vmem>>, %arg4: memref<3x512xf32, #tpu.memory_space<vmem>>) attributes {dimension_semantics = [#tpu.dimension_semantics<parallel>], iteration_bounds = array<i64: 1>, scalar_prefetch = 0 : i64, scratch_operands = 0 : i64, tpu.core_type = #tpu.core_type<tc>, window_params = [{transform_indices = @transform_0, window_bounds = array<i64: 2>}, {transform_indices = @transform_1, window_bounds = array<i64: 3, 512>}, {transform_indices = @transform_2, window_bounds = array<i64: 3, 512>}, {transform_indices = @transform_3, window_bounds = array<i64: 3, 512>}]} {
    %c0 = arith.constant 0 : index
    %0 = memref.load %arg1[%c0] : memref<2xf32, #tpu.memory_space<smem>>
    %c0_0 = arith.constant 0 : index
    %c0_1 = arith.constant 0 : index
    %1 = vector.load %arg2[%c0_0, %c0_1] : memref<3x512xf32, #tpu.memory_space<vmem>>, vector<3x512xf32>
    %2 = vector.broadcast %0 : f32 to vector<3x512xf32>
    %3 = arith.mulf %2, %1 : vector<3x512xf32>
    %c1 = arith.constant 1 : index
    %4 = memref.load %arg1[%c1] : memref<2xf32, #tpu.memory_space<smem>>
    %c0_2 = arith.constant 0 : index
    %c0_3 = arith.constant 0 : index
    %5 = vector.load %arg3[%c0_2, %c0_3] : memref<3x512xf32, #tpu.memory_space<vmem>>, vector<3x512xf32>
    %6 = vector.broadcast %4 : f32 to vector<3x512xf32>
    %7 = arith.mulf %6, %5 : vector<3x512xf32>
    %8 = arith.addf %3, %7 : vector<3x512xf32>
    %c0_4 = arith.constant 0 : index
    %c0_5 = arith.constant 0 : index
    %9 = vector.load %arg4[%c0_4, %c0_5] : memref<3x512xf32, #tpu.memory_space<vmem>>, vector<3x512xf32>
    tpu.vector_store %arg4[%c0_4, %c0_5], %8 {strides = array<i32>} : memref<3x512xf32, #tpu.memory_space<vmem>>, vector<3x512xf32>,
    return
  }
  func.func @transform_0(%arg0: i32) -> i32 {
    %c0_i32 = arith.constant 0 : i32
    %c0_i32_0 = arith.constant 0 : i32
    return %c0_i32 : i32
  }
  func.func @transform_1(%arg0: i32) -> (i32, i32) {
    %c0_i32 = arith.constant 0 : i32
    %c0_i32_0 = arith.constant 0 : i32
    return %arg0, %c0_i32 : i32, i32
  }
  func.func @transform_2(%arg0: i32) -> (i32, i32) {
    %c0_i32 = arith.constant 0 : i32
    %c0_i32_0 = arith.constant 0 : i32
    return %arg0, %c0_i32 : i32, i32
  }
  func.func @transform_3(%arg0: i32) -> (i32, i32) {
    %c0_i32 = arith.constant 0 : i32
    %c0_i32_0 = arith.constant 0 : i32
    return %arg0, %c0_i32 : i32, i32
  }
}

</mosaic_0001>

<llo_original>
// kernel: tpu_custom_call.1
$region0: #{tpu_custom_call.1}
  #allocation0 [shape = 'u32[]', space=smem, size = 0x4, offset = 0x4, fixed_abs, tag = 'smem constant byte address 0x4 - core index']
  #allocation1 [shape = 'u32[72,128]{1,0:T(1,128)}', space=vmem, size = 0x9000, scoped, tag = 'internal scratch']
  %s0 = inlined_call_operand.hbm [shape: f32[2], index: 0, kind: input, shape index: {}]
  %s1 = inlined_call_operand.hbm [shape: f32[3,512], index: 1, kind: input, shape index: {}]
  %s2 = inlined_call_operand.hbm [shape: f32[3,512], index: 2, kind: input, shape index: {}]
  %s3 = inlined_call_operand.hbm [shape: f32[3,512], index: 3, kind: output, shape index: {}]
  %s4 = sld [smem:[#allocation0]]
  $region34: #{tpu_custom_call.1} parent=0
    _
  %s6 = ssub.s32 1, %s4
  %s7 = scalar_select 0, %s6, %s4
  $region1: #{tpu_custom_call.1} parent=0
    #allocation2 [shape = 'u8[512]{0}', space=smem, size = 0x200, scoped, tag = 'input window, operand 0, single buffered']
    #allocation3 [shape = 's32[1]{0}', space=sflag, size = 0x4, scoped, tag = 'scoped memory for tpu_custom_call.1']
    #allocation4 [shape = 's32[1]{0}', space=sflag, size = 0x4, scoped, tag = 'scoped memory for tpu_custom_call.1']
    #allocation5 [shape = 's32[1]{0}', space=sflag, size = 0x4, scoped, tag = 'scoped memory for tpu_custom_call.1']
    #allocation6 [shape = 'u8[8192]{0}', space=vmem, size = 0x2000, scoped, tag = 'input window, operand 1, single buffered']
    #allocation7 [shape = 'u8[8192]{0}', space=vmem, size = 0x2000, scoped, tag = 'input window, operand 2, single buffered']
    #allocation8 [shape = 's32[1]{0}', space=sflag, size = 0x4, scoped, tag = 'scoped memory for tpu_custom_call.1']
    #allocation9 [shape = 'u8[8192]{0}', space=vmem, size = 0x2000, scoped, tag = 'output window, operand 0, single buffered']
    %8 = vsyncpa [#allocation5], 0
    %9 = vsyncpa [#allocation3], 0
    %10 = vsyncpa [#allocation8], 0
    %11 = vsyncpa [#allocation4], 0
    // Predicated region
    $region2: #{tpu_custom_call.1} parent=1 // pred_check
      _
    $region3: #{tpu_custom_call.1} parent=1 // pred_check_branch
      %13 = sbr.rel (0) target = $region5
    $region4: #{tpu_custom_call.1} parent=1 // pred_region
      %15 = vsyncadd [#allocation5], 0
      %s17 = sshll.u32 %s0, 4
      %s18 = int_to_ptr.hbm [resolvable:$true] %s17
      %20 = dma.hbm_to_smem %s18, 16, [#allocation2], [#allocation5]
    $region5: #{tpu_custom_call.1} parent=1 // pred_fallthru
      _
    // Predicated region
    $region6: #{tpu_custom_call.1} parent=1 // pred_check
      _
    $region7: #{tpu_custom_call.1} parent=1 // pred_check_branch
      %22 = sbr.rel (0) target = $region9
    $region8: #{tpu_custom_call.1} parent=1 // pred_region
      %24 = vsyncadd [#allocation3], 0
      %s26 = sshll.u32 %s1, 4
      %s27 = int_to_ptr.hbm [resolvable:$true] %s26
      %s28 = sshll.u32 [#allocation6], 4
      %s29 = int_to_ptr.vmem [resolvable:$true] %s28
      %31 = dma.hbm_to_vmem [thread:$0]  %s27, 256, %s29, [#allocation3]
    $region9: #{tpu_custom_call.1} parent=1 // pred_fallthru
      _
    // Predicated region
    $region10: #{tpu_custom_call.1} parent=1 // pred_check
      _
    $region11: #{tpu_custom_call.1} parent=1 // pred_check_branch
      %33 = sbr.rel (0) target = $region13
    $region12: #{tpu_custom_call.1} parent=1 // pred_region
      %35 = vsyncadd [#allocation8], 0
      %s37 = sshll.u32 %s2, 4
      %s38 = int_to_ptr.hbm [resolvable:$true] %s37
      %s39 = sshll.u32 [#allocation7], 4
      %s40 = int_to_ptr.vmem [resolvable:$true] %s39
      %42 = dma.hbm_to_vmem [thread:$0]  %s38, 256, %s40, [#allocation8]
    $region13: #{tpu_custom_call.1} parent=1 // pred_fallthru
      _
    // Predicated region
    $region14: #{tpu_custom_call.1} parent=1 // pred_check
      _
    $region15: #{tpu_custom_call.1} parent=1 // pred_check_branch
      %44 = sbr.rel (0) target = $region17
    $region16: #{tpu_custom_call.1} parent=1 // pred_region
      %46 = dma.done [#allocation5], 16
    $region17: #{tpu_custom_call.1} parent=1 // pred_fallthru
      _
    // Predicated region
    $region18: #{tpu_custom_call.1} parent=1 // pred_check
      _
    $region19: #{tpu_custom_call.1} parent=1 // pred_check_branch
      %48 = sbr.rel (0) target = $region21
    $region20: #{tpu_custom_call.1} parent=1 // pred_region
      %50 = dma.done [#allocation3], 256
    $region21: #{tpu_custom_call.1} parent=1 // pred_fallthru
      _
    // Predicated region
    $region22: #{tpu_custom_call.1} parent=1 // pred_check
      _
    $region23: #{tpu_custom_call.1} parent=1 // pred_check_branch
      %52 = sbr.rel (0) target = $region25
    $region24: #{tpu_custom_call.1} parent=1 // pred_region
      %54 = dma.done [#allocation8], 256
    $region25: #{tpu_custom_call.1} parent=1 // pred_fallthru
      _
    %55 = sfence
    %s56 = sld [smem:[#allocation2]]
    %v57 = vld [vmem:[#allocation6] sm:$0x77]
    %v58 = vld [vmem:[#allocation6 + $0x8] sm:$0x77]
    %v59 = vstv %s56
    %v60 = vmul.f32 %v59, %v57
    %v61 = vmul.f32 %v59, %v58
    %s62 = sld [smem:[#allocation2 + $0x1]]
    %v63 = vld [vmem:[#allocation7] sm:$0x77]
    %v64 = vld [vmem:[#allocation7 + $0x8] sm:$0x77]
    %v65 = vstv %s62
    %v66 = vmul.f32 %v65, %v63
    %v67 = vmul.f32 %v65, %v64
    %v68 = vadd.f32 %v60, %v66
    %v69 = vadd.f32 %v61, %v67
    %70 = vst [vmem:[#allocation9] sm:$0x77] %v68
    %71 = vst [vmem:[#allocation9 + $0x8] sm:$0x77] %v69
    // Predicated region
    $region26: #{tpu_custom_call.1} parent=1 // pred_check
      _
    $region27: #{tpu_custom_call.1} parent=1 // pred_check_branch
      %73 = sbr.rel (0) target = $region29
    $region28: #{tpu_custom_call.1} parent=1 // pred_region
      %75 = vsyncadd [#allocation4], 0
      %s77 = sshll.u32 [#allocation9], 4
      %s78 = int_to_ptr.vmem [resolvable:$true] %s77
      %s79 = sshll.u32 %s3, 4
      %s80 = int_to_ptr.hbm [resolvable:$true] %s79
      %82 = dma.vmem_to_hbm [thread:$0]  %s78, 256, %s80, [#allocation4]
    $region29: #{tpu_custom_call.1} parent=1 // pred_fallthru
      _
    // Predicated region
    $region30: #{tpu_custom_call.1} parent=1 // pred_check
      _
    $region31: #{tpu_custom_call.1} parent=1 // pred_check_branch
      %84 = sbr.rel (0) target = $region33
    $region32: #{tpu_custom_call.1} parent=1 // pred_region
      %86 = dma.done [#allocation4], 256
    $region33: #{tpu_custom_call.1} parent=1 // pred_fallthru
      _
    %87 = vsyncpa [#allocation3], 1
    %88 = vsyncpa [#allocation8], 1
    %89 = vsyncpa [#allocation4], 1
    %90 = vsyncpa [#allocation5], 1

</llo_original>
